<compile_context>
chip_gen: v6e
topology: v6e:2x2x1
jax: 0.10.0
libtpu: 0.0.40
codegen_flags: <defaults>
</compile_context>

<pallas_src>
import functools

import jax
import jax.numpy as jnp
from jax.experimental import pallas as pl
from jax.experimental.pallas import tpu as pltpu

FC_DIM = 64               # fc_dim in the PyTorch script
LANES = 128               # TPU vreg lane width
PACK = LANES // FC_DIM    # 2: pack two 64-feature rows into one 128-lane row
ENDTIME = 1.0             # dt of the single Euler step on the [0, 1] grid
ALPHA = 0.001


def _round_up(n, m):
    return ((n + m - 1) // m) * m


def _odeblock_kernel(x_ref, w_ref, b_ref, o_ref):
    """One Euler step on a lane-packed tile: o = x + dt * slrelu(x @ Wblk + b)."""
    x = x_ref[...]                                                   # [TB, 128]
    z = jnp.dot(x, w_ref[...], preferred_element_type=jnp.float32)   # MXU, 128-wide
    z = z + b_ref[...]                                               # [1, 128] bcast
    # Numerically stable softplus: log(1 + exp(z)) = max(z, 0) + log1p(exp(-|z|))
    softplus = jnp.maximum(z, 0.0) + jnp.log1p(jnp.exp(-jnp.abs(z)))
    f = ALPHA * z + (1.0 - ALPHA) * softplus
    o_ref[...] = (x.astype(jnp.float32) + ENDTIME * f).astype(o_ref.dtype)


def pack_ode_params(weight, bias):
    """One-time (outside the hot path) packing of the nn.Linear parameters into
    the lane-dense 128-wide layout consumed by the kernel.

    weight: [D, D] in PyTorch layout (out, in); bias: [D].
    Returns (w_block [128, 128] = blockdiag(W.T, W.T), b_block [1, 128]).
    """
    w_t = weight.T.astype(jnp.float32)                  # so x @ w_t == x @ W.T
    zeros = jnp.zeros_like(w_t)
    w_block = jnp.block([[w_t, zeros], [zeros, w_t]])   # [128, 128]
    b_block = jnp.tile(bias.astype(jnp.float32).reshape(1, FC_DIM), (1, PACK))
    return w_block, b_block


@functools.partial(jax.jit, static_argnames=("block_rows",))
def ode_block_forward(x, w_block, b_block, *, block_rows=1024):
    """x: [B, 64] float32.  w_block/b_block: from pack_ode_params."""
    B, D = x.shape
    assert D == FC_DIM

    # Lane-dense packing: B feature-rows -> ceil(B/2) rows of 128 lanes,
    # padded so the row count is a multiple of the (sublane-aligned) tile.
    rows_needed = -(-B // PACK)
    tb = min(block_rows, _round_up(rows_needed, 8))     # tile rows, multiple of 8
    rows_padded = _round_up(rows_needed, tb)
    b_padded = rows_padded * PACK
    if b_padded != B:
        x = jnp.pad(x, ((0, b_padded - B), (0, 0)))
    x_packed = x.reshape(rows_padded, LANES)            # free row-major reshape

    grid = (rows_padded // tb,)
    cost = pl.CostEstimate(
        flops=2 * rows_padded * LANES * LANES,
        transcendentals=2 * rows_padded * LANES,
        bytes_accessed=4 * (2 * rows_padded * LANES + LANES * LANES + LANES),
    )

    out_packed = pl.pallas_call(
        _odeblock_kernel,
        out_shape=jax.ShapeDtypeStruct((rows_padded, LANES), x.dtype),
        grid_spec=pltpu.PrefetchScalarGridSpec(
            num_scalar_prefetch=0,
            grid=grid,
            in_specs=[
                pl.BlockSpec((tb, LANES), lambda i: (i, 0)),     # x: pipelined tiles
                pl.BlockSpec((LANES, LANES), lambda i: (0, 0)),  # weight: VMEM-resident
                pl.BlockSpec((1, LANES), lambda i: (0, 0)),      # bias:   VMEM-resident
            ],
            out_specs=pl.BlockSpec((tb, LANES), lambda i: (i, 0)),
        ),
        compiler_params=pltpu.CompilerParams(
            dimension_semantics=("parallel",),      # megacore sharding on v7x
            vmem_limit_bytes=32 * 1024 * 1024,
        ),
        cost_estimate=cost,
    )(x_packed, w_block, b_block)

    out = out_packed.reshape(b_padded, FC_DIM)
    return out[:B] if b_padded != B else out


def reference_forward(x, weight, bias):
    z = x @ weight.T + bias
    f = ALPHA * z + (1.0 - ALPHA) * jax.nn.softplus(z)
    return x + ENDTIME * f


if __name__ == "__main__":
    key = jax.random.PRNGKey(0)
    k_x, k_b = jax.random.split(key)

    B, D = 8, FC_DIM
    x = jax.random.normal(k_x, (B, D), dtype=jnp.float32)

    # Deterministic parameters mirroring the module's __init__ (reg_flag=True):
    #   weight <- -12 * I ; bias <- small uniform values.
    weight = -12.0 * jnp.eye(D, dtype=jnp.float32)
    bound = 1.0 / jnp.sqrt(jnp.float32(D))
    bias = jax.random.uniform(k_b, (D,), dtype=jnp.float32,
                              minval=-bound, maxval=bound)

    # Pack parameters once, outside the hot path.
    w_block, b_block = pack_ode_params(weight, bias)

    out = ode_block_forward(x, w_block, b_block)
    jax.block_until_ready(out)

    ref = reference_forward(x, weight, bias)
    assert out.shape == (B, D)
    assert jnp.allclose(out, ref, atol=1e-5, rtol=1e-5), "mismatch vs reference"

    print("KERNEL_OK")
</pallas_src>

<mosaic_0001>
module attributes {stable_mosaic.version = 11 : i64} {
  func.func @_odeblock_kernel(%arg0: i32, %arg1: memref<8x128xf32, #tpu.memory_space<vmem>>, %arg2: memref<128x128xf32, #tpu.memory_space<vmem>>, %arg3: memref<1x128xf32, #tpu.memory_space<vmem>>, %arg4: memref<8x128xf32, #tpu.memory_space<vmem>>) attributes {dimension_semantics = [#tpu.dimension_semantics<parallel>], iteration_bounds = array<i64: 1>, scalar_prefetch = 0 : i64, scratch_operands = 0 : i64, tpu.core_type = #tpu.core_type<tc>, window_params = [{transform_indices = @transform_0, window_bounds = array<i64: 8, 128>}, {pipeline_mode = #tpu.pipeline_mode<synchronous>, transform_indices = @transform_1, window_bounds = array<i64: 128, 128>}, {pipeline_mode = #tpu.pipeline_mode<synchronous>, transform_indices = @transform_2, window_bounds = array<i64: 1, 128>}, {transform_indices = @transform_3, window_bounds = array<i64: 8, 128>}]} {
    %c0 = arith.constant 0 : index
    %c0_0 = arith.constant 0 : index
    %0 = vector.load %arg1[%c0, %c0_0] : memref<8x128xf32, #tpu.memory_space<vmem>>, vector<8x128xf32>
    %c0_1 = arith.constant 0 : index
    %c0_2 = arith.constant 0 : index
    %1 = vector.load %arg2[%c0_1, %c0_2] : memref<128x128xf32, #tpu.memory_space<vmem>>, vector<128x128xf32>
    %cst = arith.constant dense<0.000000e+00> : vector<8x128xf32>
    %2 = tpu.matmul %0, %1, %cst {dimension_numbers = #tpu.dot_dimension_numbers<[1], [0], [0], [1], [0, 0, 1, 1], [], []>} : vector<8x128xf32>, vector<128x128xf32>, vector<8x128xf32> -> vector<8x128xf32>
    %c0_3 = arith.constant 0 : index
    %c0_4 = arith.constant 0 : index
    %3 = vector.load %arg3[%c0_3, %c0_4] : memref<1x128xf32, #tpu.memory_space<vmem>>, vector<1x128xf32>
    %4 = vector.broadcast %3 : vector<1x128xf32> to vector<8x128xf32>
    %5 = arith.addf %2, %4 : vector<8x128xf32>
    %cst_5 = arith.constant 0.000000e+00 : f32
    %6 = vector.broadcast %cst_5 : f32 to vector<8x128xf32>
    %7 = arith.maximumf %5, %6 : vector<8x128xf32>
    %8 = math.absf %5 : vector<8x128xf32>
    %cst_6 = arith.constant 0.000000e+00 : f32
    %9 = vector.broadcast %cst_6 : f32 to vector<8x128xf32>
    %10 = arith.subf %9, %8 : vector<8x128xf32>
    %11 = math.exp %10 : vector<8x128xf32>
    %12 = math.log1p %11 : vector<8x128xf32>
    %13 = arith.addf %7, %12 : vector<8x128xf32>
    %cst_7 = arith.constant 1.000000e-03 : f32
    %14 = vector.broadcast %cst_7 : f32 to vector<8x128xf32>
    %15 = arith.mulf %14, %5 : vector<8x128xf32>
    %cst_8 = arith.constant 9.990000e-01 : f32
    %16 = vector.broadcast %cst_8 : f32 to vector<8x128xf32>
    %17 = arith.mulf %16, %13 : vector<8x128xf32>
    %18 = arith.addf %15, %17 : vector<8x128xf32>
    %cst_9 = arith.constant 1.000000e+00 : f32
    %19 = vector.broadcast %cst_9 : f32 to vector<8x128xf32>
    %20 = arith.mulf %19, %18 : vector<8x128xf32>
    %21 = arith.addf %0, %20 : vector<8x128xf32>
    %c0_10 = arith.constant 0 : index
    %c0_11 = arith.constant 0 : index
    %22 = vector.load %arg4[%c0_10, %c0_11] : memref<8x128xf32, #tpu.memory_space<vmem>>, vector<8x128xf32>
    tpu.vector_store %arg4[%c0_10, %c0_11], %21 {strides = array<i32>} : memref<8x128xf32, #tpu.memory_space<vmem>>, vector<8x128xf32>,
    return
  }
  func.func @transform_0(%arg0: i32) -> (i32, i32) {
    %c0_i32 = arith.constant 0 : i32
    %c0_i32_0 = arith.constant 0 : i32
    return %arg0, %c0_i32 : i32, i32
  }
  func.func @transform_1(%arg0: i32) -> (i32, i32) {
    %c0_i32 = arith.constant 0 : i32
    %c0_i32_0 = arith.constant 0 : i32
    %c0_i32_1 = arith.constant 0 : i32
    return %c0_i32, %c0_i32_0 : i32, i32
  }
  func.func @transform_2(%arg0: i32) -> (i32, i32) {
    %c0_i32 = arith.constant 0 : i32
    %c0_i32_0 = arith.constant 0 : i32
    %c0_i32_1 = arith.constant 0 : i32
    return %c0_i32, %c0_i32_0 : i32, i32
  }
  func.func @transform_3(%arg0: i32) -> (i32, i32) {
    %c0_i32 = arith.constant 0 : i32
    %c0_i32_0 = arith.constant 0 : i32
    return %arg0, %c0_i32 : i32, i32
  }
}

</mosaic_0001>

<llo_original>
// kernel: ode_block_forward.1
$region0: #{ode_block_forward.1}
  #allocation0 [shape = 'u32[]', space=smem, size = 0x4, offset = 0x4, fixed_abs, tag = 'smem constant byte address 0x4 - core index']
  #allocation1 [shape = 'u32[144,128]{1,0:T(1,128)}', space=vmem, size = 0x12000, scoped, tag = 'internal scratch']
  %s0 = inlined_call_operand.vmem [shape: f32[8,128], index: 0, kind: input, shape index: {}]
  %s1 = inlined_call_operand.hbm [shape: f32[128,128], index: 1, kind: input, shape index: {}]
  %s2 = inlined_call_operand.vmem [shape: f32[1,128], index: 2, kind: input, shape index: {}]
  %s3 = inlined_call_operand.vmem [shape: f32[8,128], index: 3, kind: output, shape index: {}]
  %s4 = sld [smem:[#allocation0]]
  $region26: #{ode_block_forward.1} parent=0
    _
  %s6 = ssub.s32 1, %s4
  %s7 = scalar_select 0, %s6, %s4
  $region1: #{ode_block_forward.1} parent=0
    #allocation2 [shape = 'u8[65536]{0}', space=vmem, size = 0x10000, scoped, tag = 'input window, operand 1, single buffered']
    #allocation3 [shape = 's32[1]{0}', space=sflag, size = 0x4, scoped, tag = 'scoped memory for ode_block_forward.1']
    %8 = vsyncpa [#allocation3], 0
    // Predicated region
    $region2: #{ode_block_forward.1} parent=1 // pred_check
      _
    $region3: #{ode_block_forward.1} parent=1 // pred_check_branch
      %10 = sbr.rel (0) target = $region5
    $region4: #{ode_block_forward.1} parent=1 // pred_region
      _
    $region5: #{ode_block_forward.1} parent=1 // pred_fallthru
      _
    // Predicated region
    $region6: #{ode_block_forward.1} parent=1 // pred_check
      _
    $region7: #{ode_block_forward.1} parent=1 // pred_check_branch
      %12 = sbr.rel (0) target = $region9
    $region8: #{ode_block_forward.1} parent=1 // pred_region
      %s14 = ssub.s32 2048, 2048
      %15 = vsyncadd [#allocation3], %s14
      %s16 = sshll.u32 [#allocation2], 4
      %s17 = int_to_ptr.vmem [resolvable:$true] %s16
      %22 = dma.hbm_to_vmem [thread:$0]  %s1, 2048, %s17, [#allocation3], 128, 128, 8
    $region9: #{ode_block_forward.1} parent=1 // pred_fallthru
      _
    // Predicated region
    $region10: #{ode_block_forward.1} parent=1 // pred_check
      _
    $region11: #{ode_block_forward.1} parent=1 // pred_check_branch
      %24 = sbr.rel (0) target = $region13
    $region12: #{ode_block_forward.1} parent=1 // pred_region
      _
    $region13: #{ode_block_forward.1} parent=1 // pred_fallthru
      _
    // Predicated region
    $region14: #{ode_block_forward.1} parent=1 // pred_check
      _
    $region15: #{ode_block_forward.1} parent=1 // pred_check_branch
      %26 = sbr.rel (0) target = $region17
    $region16: #{ode_block_forward.1} parent=1 // pred_region
      %27 = dma.done [#allocation3], 2048
    $region17: #{ode_block_forward.1} parent=1 // pred_fallthru
      _
    %v28 = vld [vmem:[%s0] sm:$0xff]
    %v29 = vld [vmem:[#allocation2] sm:$0xff]
    %v30 = vld [vmem:[#allocation2 + $0x8] sm:$0xff]
    %v31 = vld [vmem:[#allocation2 + $0x10] sm:$0xff]
    %v32 = vld [vmem:[#allocation2 + $0x18] sm:$0xff]
    %v33 = vld [vmem:[#allocation2 + $0x20] sm:$0xff]
    %v34 = vld [vmem:[#allocation2 + $0x28] sm:$0xff]
    %v35 = vld [vmem:[#allocation2 + $0x30] sm:$0xff]
    %v36 = vld [vmem:[#allocation2 + $0x38] sm:$0xff]
    %v37 = vld [vmem:[#allocation2 + $0x40] sm:$0xff]
    %v38 = vld [vmem:[#allocation2 + $0x48] sm:$0xff]
    %v39 = vld [vmem:[#allocation2 + $0x50] sm:$0xff]
    %v40 = vld [vmem:[#allocation2 + $0x58] sm:$0xff]
    %v41 = vld [vmem:[#allocation2 + $0x60] sm:$0xff]
    %v42 = vld [vmem:[#allocation2 + $0x68] sm:$0xff]
    %v43 = vld [vmem:[#allocation2 + $0x70] sm:$0xff]
    %v44 = vld [vmem:[#allocation2 + $0x78] sm:$0xff]
    %v45 = vld [vmem:[%s2] sm:$0x1]
    %v47 = vlaneseq
    %v48 = vshrl.u32 %v47, 7
    %v49 = vsub.s32 0, %v48
    %v50 = vrot.slane %v45, %v49
    %52 = vmatprep.subr.mxu0 0.0
    %53 = vmatpush1.msra.mxu0 %v44
    %54 = vmatprep.subr.mxu0 0.0
    %55 = vmatpush1.msra.mxu0 %v43
    %56 = vmatprep.subr.mxu0 0.0
    %57 = vmatpush1.msra.mxu0 %v42
    %58 = vmatprep.subr.mxu0 0.0
    %59 = vmatpush1.msra.mxu0 %v41
    %60 = vmatprep.subr.mxu0 0.0
    %61 = vmatpush1.msra.mxu0 %v40
    %62 = vmatprep.subr.mxu0 0.0
    %63 = vmatpush1.msra.mxu0 %v39
    %64 = vmatprep.subr.mxu0 0.0
    %65 = vmatpush1.msra.mxu0 %v38
    %66 = vmatprep.subr.mxu0 0.0
    %67 = vmatpush1.msra.mxu0 %v37
    %68 = vmatprep.subr.mxu0 0.0
    %69 = vmatpush1.msra.mxu0 %v36
    %70 = vmatprep.subr.mxu0 0.0
    %71 = vmatpush1.msra.mxu0 %v35
    %72 = vmatprep.subr.mxu0 0.0
    %73 = vmatpush1.msra.mxu0 %v34
    %74 = vmatprep.subr.mxu0 0.0
    %75 = vmatpush1.msra.mxu0 %v33
    %76 = vmatprep.subr.mxu0 0.0
    %77 = vmatpush1.msra.mxu0 %v32
    %78 = vmatprep.subr.mxu0 0.0
    %79 = vmatpush1.msra.mxu0 %v31
    %80 = vmatprep.subr.mxu0 0.0
    %81 = vmatpush1.msra.mxu0 %v30
    %82 = vmatprep.subr.mxu0 0.0
    %83 = vmatpush1.msra.mxu0 %v29
    %84 = vmatprep.subr.mxu0 0.0
    %85 = vmatpush2.msra.mxu0 0.0
    %86 = vmatprep.subr.mxu0 0.0
    %87 = vmatpush2.msra.mxu0 0.0
    %88 = vmatprep.subr.mxu0 0.0
    %89 = vmatpush2.msra.mxu0 0.0
    %90 = vmatprep.subr.mxu0 0.0
    %91 = vmatpush2.msra.mxu0 0.0
    %92 = vmatprep.subr.mxu0 0.0
    %93 = vmatpush2.msra.mxu0 0.0
    %94 = vmatprep.subr.mxu0 0.0
    %95 = vmatpush2.msra.mxu0 0.0
    %96 = vmatprep.subr.mxu0 0.0
    %97 = vmatpush2.msra.mxu0 0.0
    %98 = vmatprep.subr.mxu0 0.0
    %99 = vmatpush2.msra.mxu0 0.0
    %100 = vmatprep.subr.mxu0 0.0
    %101 = vmatpush2.msra.mxu0 0.0
    %102 = vmatprep.subr.mxu0 0.0
    %103 = vmatpush2.msra.mxu0 0.0
    %104 = vmatprep.subr.mxu0 0.0
    %105 = vmatpush2.msra.mxu0 0.0
    %106 = vmatprep.subr.mxu0 0.0
    %107 = vmatpush2.msra.mxu0 0.0
    %108 = vmatprep.subr.mxu0 0.0
    %109 = vmatpush2.msra.mxu0 0.0
    %110 = vmatprep.subr.mxu0 0.0
    %111 = vmatpush2.msra.mxu0 0.0
    %112 = vmatprep.subr.mxu0 0.0
    %113 = vmatpush2.msra.mxu0 0.0
    %114 = vmatprep.subr.mxu0 0.0
    %115 = vmatpush2.msra.mxu0 0.0
    %116 = vmatprep.mubr.f32.mxu0 0.0
    %117 = vmatmul.mubr.f32.gmra.mxu0 %v28
    %v118 = vpop.f32.mrf.mxu0
    %v119 = vadd.f32 %v50, %v118
    %v120 = vpop.f32.mrf.mxu0
    %121 = vdwg.mxu0
    %v122 = vmax.f32 %v119, 0.0
    %v123 = vand.u32 2147483647, %v119
    %v124 = vsub.f32 0.0, %v123
    %v125 = vmul.f32 %v124, 1.442695
    %v126 = vpow.pop %v125
    %v127 = vadd.f32 %v126, 1.0
    %v128 = vlog2.pop %v127
    %v129 = vmul.f32 %v128, 0.6931472
    %v130 = vmul.f32 -0.5, %v126
    %v131 = vadd.f32 %v130, 1.0
    %v132 = vmul.f32 %v131, %v126
    %v133 = vand.u32 2147483647, %v126
    %vm134 = vcmp.lt.f32.partialorder %v133, 0.0004427343
    %v135 = vsel %vm134, %v132, %v129
    %v136 = vadd.f32 %v122, %v135
    %v137 = vmul.f32 %v119, 0.001
    %v138 = vmul.f32 %v136, 0.999
    %v139 = vadd.f32 %v137, %v138
    %v140 = vadd.f32 %v28, %v139
    %141 = vst [vmem:[%s3] sm:$0xff] %v140
    // Predicated region
    $region18: #{ode_block_forward.1} parent=1 // pred_check
      _
    $region19: #{ode_block_forward.1} parent=1 // pred_check_branch
      %143 = sbr.rel (0) target = $region21
    $region20: #{ode_block_forward.1} parent=1 // pred_region
      _
    $region21: #{ode_block_forward.1} parent=1 // pred_fallthru
      _
    // Predicated region
    $region22: #{ode_block_forward.1} parent=1 // pred_check
      _
    $region23: #{ode_block_forward.1} parent=1 // pred_check_branch
      %145 = sbr.rel (0) target = $region25
    $region24: #{ode_block_forward.1} parent=1 // pred_region
      _
    $region25: #{ode_block_forward.1} parent=1 // pred_fallthru
      _
    %146 = vsyncpa [#allocation3], 1

</llo_original>
